<compile_context>
chip_gen: v7x
topology: tpu7x:2x2x1
jax: 0.10.0
libtpu: 0.0.40
codegen_flags: <defaults>
</compile_context>

<pallas_src>
import functools

import jax
import jax.numpy as jnp
from jax.experimental import pallas as pl
from jax.experimental.pallas import tpu as pltpu


_SMALL_INPUT_BYTES = 1 << 20            # below this, plain jnp.max wins
_MAX_LANE_TILE = 2048                   # lane-tile cap (large DMA descriptors)
_FALLBACK_VMEM_BYTES = 64 * 1024 * 1024  # conservative (fits v7x's 64 MiB)


def _round_up(a, b):
    return (a + b - 1) // b * b


@functools.lru_cache(maxsize=None)
def _vmem_limit_bytes():
    """Generation-aware scoped-VMEM limit (v5e/v6e: 128 MiB physical, v7x: 64 MiB)."""
    try:
        cap = int(pltpu.get_tpu_info().vmem_capacity_bytes)
    except Exception:
        cap = 0
    if cap <= 0:
        cap = _FALLBACK_VMEM_BYTES
    # Keep ~25% headroom for compiler scratch; never request more than 96 MiB.
    return int(min(cap * 3 // 4, 96 * 1024 * 1024))


def _block_budget():
    # Bytes for ONE in-flight input block; x2 double-buffering still leaves
    # half the scoped limit for outputs + compiler temps.
    return _vmem_limit_bytes() // 4


def _compiler_params(dimension_semantics):
    return pltpu.CompilerParams(
        dimension_semantics=dimension_semantics,
        vmem_limit_bytes=_vmem_limit_bytes(),
    )


def _min_value(dtype):
    dtype = jnp.dtype(dtype)
    if jnp.issubdtype(dtype, jnp.floating):
        return jnp.array(-jnp.inf, dtype=dtype)
    return jnp.array(jnp.iinfo(dtype).min, dtype=dtype)


def _legal_tile(full, cap, align):
    """Largest legal tile for a (sub)lane dim: the full dim, or an align-multiple <= cap."""
    if cap >= full:
        return full
    return max(align, (cap // align) * align)


def _split_for_cores(full, tile, align):
    """Ensure >=2 blocks along a parallel axis (keeps both v7x TensorCores busy)."""
    if tile >= full and full >= 2 * align:
        return _round_up(pl.cdiv(full, 2), align)
    return tile


# ---------------------------------------------------------------------------
# Kernels
# ---------------------------------------------------------------------------
def _max_last_kernel(x_ref, o_ref):
    # x_ref: (tile_rows, R); o_ref: (1, tile_rows).
    # Reduce over lanes first (result is R-times smaller), then relayout only
    # the tiny column to a lane-dense row -> single unmasked store.
    col = jnp.max(x_ref[...], axis=-1, keepdims=True)       # (tile_rows, 1)
    o_ref[...] = jnp.transpose(col, (1, 0))                  # (1, tile_rows)


def _max_last_rtiled_kernel(x_ref, o_ref, *, total_r, tile_r):
    # Grid: (row blocks [parallel], R blocks [arbitrary]).  Accumulate into the
    # VMEM-resident output block across the R axis.
    k = pl.program_id(1)
    x = x_ref[...]
    if total_r % tile_r != 0:  # mask the padded tail of the reduced axis
        lane = jax.lax.broadcasted_iota(jnp.int32, x_ref.shape, 1)
        x = jnp.where(k * tile_r + lane < total_r, x, _min_value(x_ref.dtype))
    part = jnp.transpose(jnp.max(x, axis=-1, keepdims=True), (1, 0))  # (1, tile_rows)

    @pl.when(k == 0)
    def _():
        o_ref[...] = part

    @pl.when(k != 0)
    def _():
        o_ref[...] = jnp.maximum(o_ref[...], part)


def _max_mid_kernel(x_ref, o_ref):
    # x_ref: (tile_o, R, tile_i) -- R on sublanes, tile_i on lanes.
    # o_ref: (tile_o, 1, tile_i) -- lane-dense store, no relayout needed.
    o_ref[...] = jnp.max(x_ref[...], axis=1, keepdims=True)


def _max_mid_rtiled_kernel(x_ref, o_ref, *, total_r, tile_r):
    # Grid: (outer [parallel], inner blocks [parallel], R blocks [arbitrary]).
    k = pl.program_id(2)
    x = x_ref[...]
    if total_r % tile_r != 0:
        sub = jax.lax.broadcasted_iota(jnp.int32, x_ref.shape, 1)
        x = jnp.where(k * tile_r + sub < total_r, x, _min_value(x_ref.dtype))
    part = jnp.max(x, axis=1, keepdims=True)

    @pl.when(k == 0)
    def _():
        o_ref[...] = part

    @pl.when(k != 0)
    def _():
        o_ref[...] = jnp.maximum(o_ref[...], part)


# ---------------------------------------------------------------------------
# Wrappers
# ---------------------------------------------------------------------------
def _max_reduce_last(x2d, block_budget=None):
    """Max over the last axis of a 2-D (rows, R) array; returns shape (rows,)."""
    rows, r = x2d.shape
    itemsize = jnp.dtype(x2d.dtype).itemsize
    budget = _block_budget() if block_budget is None else block_budget
    out_shape = jax.ShapeDtypeStruct((1, rows), x2d.dtype)
    cost = pl.CostEstimate(
        flops=rows * r,
        transcendentals=0,
        bytes_accessed=(rows * r + rows) * itemsize,
    )

    row_bytes = _round_up(r, 128) * itemsize         # VMEM bytes of one full-R row
    min_rows = min(128, _round_up(rows, 8))

    if min_rows * row_bytes <= budget:
        # Full reduced axis in one block; single parallel grid axis over rows.
        tile_rows = _legal_tile(rows, budget // row_bytes, 128)
        tile_rows = _split_for_cores(rows, tile_rows, 128)
        grid = (pl.cdiv(rows, tile_rows),)
        out = pl.pallas_call(
            _max_last_kernel,
            out_shape=out_shape,
            grid=grid,
            in_specs=[pl.BlockSpec((tile_rows, r), lambda i: (i, 0))],
            out_specs=pl.BlockSpec((1, tile_rows), lambda i: (0, i)),
            compiler_params=_compiler_params(("parallel",)),
            cost_estimate=cost,
        )(x2d)
    else:
        # Reduced axis too large for one block: tile R onto a trailing
        # "arbitrary" grid axis and accumulate into the resident output block.
        tile_r = _legal_tile(r, max(128, budget // (128 * itemsize)), 128)
        unit = _round_up(tile_r, 128) * itemsize
        tile_rows = _legal_tile(rows, max(8, budget // unit), 128)
        tile_rows = _split_for_cores(rows, tile_rows, 128)
        grid = (pl.cdiv(rows, tile_rows), pl.cdiv(r, tile_r))
        kernel = functools.partial(_max_last_rtiled_kernel, total_r=r, tile_r=tile_r)
        out = pl.pallas_call(
            kernel,
            out_shape=out_shape,
            grid=grid,
            in_specs=[pl.BlockSpec((tile_rows, tile_r), lambda i, k: (i, k))],
            out_specs=pl.BlockSpec((1, tile_rows), lambda i, k: (0, i)),
            compiler_params=_compiler_params(("parallel", "arbitrary")),
            cost_estimate=cost,
        )(x2d)
    return out.reshape(rows)


def _max_reduce_mid(x3d, block_budget=None):
    """Max over axis 1 of a 3-D (outer, R, inner) array; returns (outer, 1, inner)."""
    outer, r, inner = x3d.shape
    itemsize = jnp.dtype(x3d.dtype).itemsize
    budget = _block_budget() if block_budget is None else block_budget
    out_shape = jax.ShapeDtypeStruct((outer, 1, inner), x3d.dtype)
    cost = pl.CostEstimate(
        flops=outer * r * inner,
        transcendentals=0,
        bytes_accessed=(outer * r * inner + outer * inner) * itemsize,
    )

    tile_i = _legal_tile(inner, _MAX_LANE_TILE, 128)
    lane_bytes = _round_up(tile_i, 128) * itemsize
    in_unit = _round_up(r, 8) * lane_bytes            # input bytes per tile_o = 1
    out_unit = 8 * lane_bytes                         # padded (1, tile_i) output slab

    if in_unit + out_unit <= budget:
        # Full reduced axis in one block.
        tile_o = max(1, min(outer, budget // (in_unit + out_unit)))
        # Keep >=2 parallel blocks for dual-core chips (v7x).
        if pl.cdiv(outer, tile_o) * pl.cdiv(inner, tile_i) < 2:
            if outer >= 2:
                tile_o = pl.cdiv(outer, 2)
            elif inner >= 256:
                tile_i = _round_up(pl.cdiv(inner, 2), 128)
        grid = (pl.cdiv(outer, tile_o), pl.cdiv(inner, tile_i))
        out = pl.pallas_call(
            _max_mid_kernel,
            out_shape=out_shape,
            grid=grid,
            in_specs=[pl.BlockSpec((tile_o, r, tile_i), lambda i, j: (i, 0, j))],
            out_specs=pl.BlockSpec((tile_o, 1, tile_i), lambda i, j: (i, 0, j)),
            compiler_params=_compiler_params(("parallel", "parallel")),
            cost_estimate=cost,
        )(x3d)
    else:
        # Reduced axis too large: trailing "arbitrary" R axis with accumulation.
        tile_i = _legal_tile(
            inner, min(_MAX_LANE_TILE, max(128, budget // (8 * itemsize))), 128)
        lane_bytes = _round_up(tile_i, 128) * itemsize
        tile_r = _legal_tile(r, max(8, budget // lane_bytes), 8)
        grid = (outer, pl.cdiv(inner, tile_i), pl.cdiv(r, tile_r))
        kernel = functools.partial(_max_mid_rtiled_kernel, total_r=r, tile_r=tile_r)
        out = pl.pallas_call(
            kernel,
            out_shape=out_shape,
            grid=grid,
            in_specs=[pl.BlockSpec((1, tile_r, tile_i), lambda i, j, k: (i, k, j))],
            out_specs=pl.BlockSpec((1, 1, tile_i), lambda i, j, k: (i, 0, j)),
            compiler_params=_compiler_params(("parallel", "parallel", "arbitrary")),
            cost_estimate=cost,
        )(x3d)
    return out


def max_layer(x, dim):
    """Pallas equivalent of PyTorch `x.max(dim=dim, keepdim=True).values`."""
    dim = dim % x.ndim
    shape = x.shape
    r = shape[dim]
    out_shape = shape[:dim] + (1,) + shape[dim + 1:]

    if r == 1:
        # Max over a singleton axis with keepdim is the identity.
        return x

    itemsize = jnp.dtype(x.dtype).itemsize
    if x.size * itemsize < _SMALL_INPUT_BYTES:
        # Sub-VMEM-sized input: pallas_call launch/pipeline overhead dominates;
        # XLA's fused reduction is faster on every TPU generation.
        return jnp.max(x, axis=dim, keepdims=True)

    outer = 1
    for s in shape[:dim]:
        outer *= s
    inner = 1
    for s in shape[dim + 1:]:
        inner *= s

    if inner == 1:
        # `dim` is (effectively) the trailing axis: rows x R layout, free reshape.
        flat = _max_reduce_last(x.reshape(outer, r))          # (outer,)
        return flat.reshape(out_shape)

    # `dim` sits in the middle: free contiguous reshape to (outer, R, inner)
    # and a sublane reduction -- no HBM transpose pass.
    red = _max_reduce_mid(x.reshape(outer, r, inner))         # (outer, 1, inner)
    return red.reshape(out_shape)


if __name__ == "__main__":
    key = jax.random.PRNGKey(0)

    # 1) FBCNet-style small NCHW input (tiny-input fast path).
    x_small = jax.random.normal(key, (2, 4, 16, 16), dtype=jnp.float32)
    y = jax.block_until_ready(max_layer(x_small, dim=3))
    assert y.shape == (2, 4, 16, 1), y.shape
    assert jnp.array_equal(y, jnp.max(x_small, axis=3, keepdims=True))
    y2 = jax.block_until_ready(max_layer(x_small, dim=2))
    assert y2.shape == (2, 4, 1, 16), y2.shape
    assert jnp.array_equal(y2, jnp.max(x_small, axis=2, keepdims=True))

    # 2) Larger (but still small) input that exercises the Pallas kernels:
    #    (batch, bands, channels, time) as FBCNet uses.
    k1, _ = jax.random.split(key)
    xl = jax.random.normal(k1, (2, 9, 16, 1000), dtype=jnp.float32)   # ~1.1 MiB

    # Last-axis (temporal) max -> lane-dense last-axis kernel.
    yl = jax.block_until_ready(max_layer(xl, dim=3))
    assert yl.shape == (2, 9, 16, 1), yl.shape
    assert jnp.array_equal(yl, jnp.max(xl, axis=3, keepdims=True))

    # Mid-axis max -> sublane-reduce mid kernel (no HBM transpose).
    ym = jax.block_until_ready(max_layer(xl, dim=1))
    assert ym.shape == (2, 1, 16, 1000), ym.shape
    assert jnp.array_equal(ym, jnp.max(xl, axis=1, keepdims=True))

    # 3) Force the R-tiled accumulator kernels with a tiny block budget so the
    #    large-reduced-axis paths are also compile/correctness checked.
    x2d = xl.reshape(-1, 1000)
    yrt = jax.block_until_ready(_max_reduce_last(x2d, block_budget=64 * 1024))
    assert jnp.array_equal(yrt, jnp.max(x2d, axis=-1))

    x3d = xl.reshape(18, 16, 1000)
    yrt_mid = jax.block_until_ready(_max_reduce_mid(x3d, block_budget=16 * 1024))
    assert jnp.array_equal(yrt_mid, jnp.max(x3d, axis=1, keepdims=True))

    print("KERNEL_OK")
</pallas_src>

<mosaic_0001>
module attributes {stable_mosaic.version = 11 : i64} {
  func.func @_max_last_kernel(%arg0: i32, %arg1: memref<256x1000xf32, #tpu.memory_space<vmem>>, %arg2: memref<1x256xf32, #tpu.memory_space<vmem>>) attributes {dimension_semantics = [#tpu.dimension_semantics<parallel>], iteration_bounds = array<i64: 2>, scalar_prefetch = 0 : i64, scratch_operands = 0 : i64, tpu.core_type = #tpu.core_type<tc>, window_params = [{transform_indices = @transform_0, window_bounds = array<i64: 256, 1000>}, {transform_indices = @transform_1, window_bounds = array<i64: 1, 256>}]} {
    %c0 = arith.constant 0 : index
    %c0_0 = arith.constant 0 : index
    %0 = vector.load %arg1[%c0, %c0_0] : memref<256x1000xf32, #tpu.memory_space<vmem>>, vector<256x1000xf32>
    %cst = arith.constant dense<0xFF800000> : vector<256xf32>
    %1 = vector.multi_reduction <maximumf>, %0, %cst [1] : vector<256x1000xf32> to vector<256xf32>
    %2 = vector.shape_cast %1 : vector<256xf32> to vector<256x1xf32>
    %3 = tpu.transpose %2, [1, 0] : vector<256x1xf32> -> vector<1x256xf32>
    %c0_1 = arith.constant 0 : index
    %c0_2 = arith.constant 0 : index
    %4 = vector.load %arg2[%c0_1, %c0_2] : memref<1x256xf32, #tpu.memory_space<vmem>>, vector<1x256xf32>
    tpu.vector_store %arg2[%c0_1, %c0_2], %3 {strides = array<i32>} : memref<1x256xf32, #tpu.memory_space<vmem>>, vector<1x256xf32>,
    return
  }
  func.func @transform_0(%arg0: i32) -> (i32, i32) {
    %c0_i32 = arith.constant 0 : i32
    %c0_i32_0 = arith.constant 0 : i32
    return %arg0, %c0_i32 : i32, i32
  }
  func.func @transform_1(%arg0: i32) -> (i32, i32) {
    %c0_i32 = arith.constant 0 : i32
    %c0_i32_0 = arith.constant 0 : i32
    return %c0_i32, %arg0 : i32, i32
  }
}

</mosaic_0001>

<llo_original>
// kernel: tpu_custom_call.1
$region0: #{tpu_custom_call.1}
  #allocation0 [shape = 'u32[]', space=smem, size = 0x4, offset = 0x4, fixed_abs, tag = 'smem constant byte address 0x4 - core index']
  #allocation1 [shape = 'u32[144,128]{1,0:T(1,128)}', space=vmem, size = 0x12000, scoped, tag = 'internal scratch']
  %s0 = inlined_call_operand.hbm [shape: f32[288,1000], index: 0, kind: input, shape index: {}]
  %s1 = inlined_call_operand.hbm [shape: f32[1,288], index: 1, kind: output, shape index: {}]
  %s2 = sld [smem:[#allocation0]]
  $region41: #{tpu_custom_call.1} parent=0
    _
  %s4 = ssub.s32 1, %s2
  %s5 = scalar_select 0, %s4, %s2
  $region1: #{tpu_custom_call.1} parent=0
    #allocation2 [shape = 'u8[2097152]{0}', space=vmem, size = 0x200000, scoped, tag = 'input window, operand 0']
    #allocation3 [shape = 's32[2]{0}', space=sflag, size = 0x8, scoped, tag = 'scoped memory for tpu_custom_call.1']
    #allocation4 [shape = 's32[2]{0}', space=sflag, size = 0x8, scoped, tag = 'scoped memory for tpu_custom_call.1']
    #allocation5 [shape = 'u8[2048]{0}', space=vmem, size = 0x800, scoped, tag = 'output window, operand 0']
    %6 = vsyncpa [#allocation3], 0
    %s7 = scalar_lea.sflag [#allocation3], 1
    %8 = vsyncpa %s7, 0
    %9 = vsyncpa [#allocation4], 0
    %s10 = scalar_lea.sflag [#allocation4], 1
    %11 = vsyncpa %s10, 0
    loop: start=0, step=1, limit=4
    $region2: #{tpu_custom_call.1} parent=1 // loop_pre_header
      _
    $region3: #{tpu_custom_call.1} parent=1 // loop_header
      %s13 = sphi 0, %s17
      %p14 = scmp.ge.s32.totalorder %s13, 4
      %s23 = sphi 0, %s25
      %s26 = sphi 0, %s23
      %s27 = sphi 0, %s26
      %s43 = sphi 0, %s27
      %s49 = sphi 0, %s51
      %s52 = sphi 0, %s49
      %s53 = sphi 0, %s52
      %s69 = sphi 0, %s53
    $region4: #{tpu_custom_call.1} parent=1 // loop_header_branch
      %16 = sbr.rel (%p14) target = $region8
    $region5: #{tpu_custom_call.1} parent=1 // loop_body
      %s18 = ssub.s32 %s13, 1
      %s19 = ssub.s32 %s13, 2
      %s20 = sadd.s32 %s13, 1
      %s21 = ssub.s32 %s13, %s20
      %p22 = scmp.eq.s32.totalorder %s21, 0
      %s24 = sadd.s32 %s23, 1
      %s25 = scalar_select %p22, %s23, %s24
      %p28 = pneg %p22
      %p29 = scmp.eq.s32.totalorder %s13, 1
      %p30 = por %p28, %p29
      %p31 = scmp.ne.s32.totalorder %s23, %s26
      %p32 = scmp.eq.s32.totalorder %s13, 0
      %p33 = por %p31, %p32
      %p34 = scmp.ne.s32.totalorder %s23, %s26
      %p35 = scmp.eq.s32.totalorder %s18, 1
      %p36 = por %p34, %p35
      %p37 = scmp.ne.s32.totalorder %s26, %s27
      %p38 = scmp.eq.s32.totalorder %s18, 0
      %p39 = por %p37, %p38
      %p40 = scmp.ne.s32.totalorder %s26, %s27
      %p41 = scmp.eq.s32.totalorder %s19, 1
      %p42 = por %p40, %p41
      %p44 = scmp.ne.s32.totalorder %s27, %s43
      %p45 = scmp.eq.s32.totalorder %s19, 0
      %p46 = por %p44, %p45
      %s47 = ssub.s32 %s13, %s20
      %p48 = scmp.eq.s32.totalorder %s47, 0
      %s50 = sadd.s32 %s49, 1
      %s51 = scalar_select %p48, %s49, %s50
      %p54 = pneg %p48
      %p55 = scmp.eq.s32.totalorder %s13, 1
      %p56 = por %p54, %p55
      %p57 = scmp.ne.s32.totalorder %s49, %s52
      %p58 = scmp.eq.s32.totalorder %s13, 0
      %p59 = por %p57, %p58
      %p60 = scmp.ne.s32.totalorder %s49, %s52
      %p61 = scmp.eq.s32.totalorder %s18, 1
      %p62 = por %p60, %p61
      %p63 = scmp.ne.s32.totalorder %s52, %s53
      %p64 = scmp.eq.s32.totalorder %s18, 0
      %p65 = por %p63, %p64
      %p66 = scmp.ne.s32.totalorder %s52, %s53
      %p67 = scmp.eq.s32.totalorder %s19, 1
      %p68 = por %p66, %p67
      %p70 = scmp.ne.s32.totalorder %s53, %s69
      %p71 = scmp.eq.s32.totalorder %s19, 0
      %p72 = por %p70, %p71
      %p73 = scmp.le.s32.totalorder 1, %s13
      %p74 = scmp.lt.s32.totalorder %s13, 3
      %p75 = pnand %p73, %p74
      %p76 = pneg %p75
      // Predicated region
      $region9: #{tpu_custom_call.1} parent=5 // pred_check
        _
      $region10: #{tpu_custom_call.1} parent=5 // pred_check_branch
        %78 = sbr.rel (%p75) target = $region12
      $region11: #{tpu_custom_call.1} parent=5 // pred_region
        %s79 = ssub.s32 %s13, 1
      $region12: #{tpu_custom_call.1} parent=5 // pred_fallthru
        _
      %p80 = scmp.lt.s32.totalorder %s13, 2
      // Predicated region
      $region13: #{tpu_custom_call.1} parent=5 // pred_check
        %p81 = pneg %p80
      $region14: #{tpu_custom_call.1} parent=5 // pred_check_branch
        %83 = sbr.rel (%p81) target = $region16
      $region15: #{tpu_custom_call.1} parent=5 // pred_region
        // Predicated region
        $region17: #{tpu_custom_call.1} parent=15 // pred_check
          %p84 = pneg %p33
        $region18: #{tpu_custom_call.1} parent=15 // pred_check_branch
          %86 = sbr.rel (%p84) target = $region20
        $region19: #{tpu_custom_call.1} parent=15 // pred_region
          %s87 = sand.u32 %s23, 1
          %s88 = scalar_lea.sflag [#allocation3], %s87
          %s89 = sand.u32 %s23, 1
          %s90 = smul.addr %s89, 2048
          %s91 = scalar_lea.vmem [#allocation2], %s90
          %s92 = smul.u32 32, %s13
          %s93 = ssub.s32 36, %s92
          %p94 = scmp.lt.s32.totalorder %s93, 32
          %s95 = scalar_select %p94, %s93, 32
          %s96 = smul.u32 128, %s95
          %s97 = smul.u32 %s96, 8
          %s99 = ssub.s32 32768, %s97
          %100 = vsyncadd %s88, %s99
          %p101 = scmp.ne.s32.totalorder 0, %s97
          %s102 = smul.addr %s92, 8
          %s103 = smul.addr %s102, 128
          %s104 = scalar_lea.hbm %s0, %s103
          %s105 = smul.u32 64, %s95
          %s106 = sshll.u32 %s91, 4
          %s107 = int_to_ptr.vmem [resolvable:$true] %s106
          %s108 = sshll.u32 %s105, 4
          %112 = dma.hbm_to_vmem [thread:$0]  (%p101), %s104, %s108, %s107, %s88, 1024, 1024, 64
        $region20: #{tpu_custom_call.1} parent=15 // pred_fallthru
          _
      $region16: #{tpu_custom_call.1} parent=5 // pred_fallthru
        _
      %p113 = scmp.le.s32.totalorder 1, %s13
      %p114 = scmp.lt.s32.totalorder %s13, 3
      %p115 = pnand %p113, %p114
      %p116 = pneg %p115
      // Predicated region
      $region21: #{tpu_custom_call.1} parent=5 // pred_check
        _
      $region22: #{tpu_custom_call.1} parent=5 // pred_check_branch
        %118 = sbr.rel (%p115) target = $region24
      $region23: #{tpu_custom_call.1} parent=5 // pred_region
        %s119 = ssub.s32 %s13, 1
        %s120 = sand.u32 %s26, 1
        %s121 = scalar_lea.sflag [#allocation3], %s120
        %s122 = sand.u32 %s26, 1
        %s123 = smul.addr %s122, 2048
        %s124 = scalar_lea.vmem [#allocation2], %s123
        // Predicated region
        $region25: #{tpu_custom_call.1} parent=23 // pred_check
          %p125 = pneg %p39
        $region26: #{tpu_custom_call.1} parent=23 // pred_check_branch
          %127 = sbr.rel (%p125) target = $region28
        $region27: #{tpu_custom_call.1} parent=23 // pred_region
          %128 = dma.done %s121, 32768
        $region28: #{tpu_custom_call.1} parent=23 // pred_fallthru
          _
        %s129 = sand.u32 %s26, 1
        %s130 = scalar_lea.sflag [#allocation3], %s129
        %s131 = sand.u32 %s26, 1
        %s132 = smul.addr %s131, 2048
        %s133 = scalar_lea.vmem [#allocation2], %s132
        %p134 = pneg %p39
        %p135 = pneg %p36
        %p136 = pneg %p65
        %p137 = pneg %p62
        %s138 = sand.u32 %s52, 1
        %s139 = scalar_lea.sflag [#allocation4], %s138
        %s140 = sand.u32 %s52, 1
        %s141 = smul.addr %s140, 2
        %s142 = scalar_lea.vmem [#allocation5], %s141
        %s143 = smul.u32 32, %s18
        %s144 = ssub.s32 36, %s143
        %p145 = scmp.lt.s32.totalorder %s144, 32
        %s146 = scalar_select %p145, %s144, 32
        %s147 = smul.u32 128, %s146
        %s148 = smul.u32 %s147, 8
        %s149 = smul.u32 2, %s18
        %s150 = ssub.s32 3, %s149
        %p151 = scmp.lt.s32.totalorder %s150, 2
        %s152 = scalar_select %p151, %s150, 2
        %s153 = smul.u32 16, %s152
        %v154 = vld [vmem:[%s124] sm:$0xff]
        %v155 = vld [vmem:[%s124 + $0x8] sm:$0xff]
        %v156 = vld [vmem:[%s124 + $0x10] sm:$0xff]
        %v157 = vld [vmem:[%s124 + $0x18] sm:$0xff]
        %v158 = vld [vmem:[%s124 + $0x20] sm:$0xff]
        %v159 = vld [vmem:[%s124 + $0x28] sm:$0xff]
        %v160 = vld [vmem:[%s124 + $0x30] sm:$0xff]
        %v161 = vld [vmem:[%s124 + $0x38] sm:$0xff]
        %v162 = vld [vmem:[%s124 + $0x40] sm:$0xff]
        %v163 = vld [vmem:[%s124 + $0x48] sm:$0xff]
        %v164 = vld [vmem:[%s124 + $0x50] sm:$0xff]
        %v165 = vld [vmem:[%s124 + $0x58] sm:$0xff]
        %v166 = vld [vmem:[%s124 + $0x60] sm:$0xff]
        %v167 = vld [vmem:[%s124 + $0x68] sm:$0xff]
        %v168 = vld [vmem:[%s124 + $0x70] sm:$0xff]
        %v169 = vld [vmem:[%s124 + $0x78] sm:$0xff]
        %v170 = vld [vmem:[%s124 + $0x80] sm:$0xff]
        %v171 = vld [vmem:[%s124 + $0x88] sm:$0xff]
        %v172 = vld [vmem:[%s124 + $0x90] sm:$0xff]
        %v173 = vld [vmem:[%s124 + $0x98] sm:$0xff]
        %v174 = vld [vmem:[%s124 + $0xa0] sm:$0xff]
        %v175 = vld [vmem:[%s124 + $0xa8] sm:$0xff]
        %v176 = vld [vmem:[%s124 + $0xb0] sm:$0xff]
        %v177 = vld [vmem:[%s124 + $0xb8] sm:$0xff]
        %v178 = vld [vmem:[%s124 + $0xc0] sm:$0xff]
        %v179 = vld [vmem:[%s124 + $0xc8] sm:$0xff]
        %v180 = vld [vmem:[%s124 + $0xd0] sm:$0xff]
        %v181 = vld [vmem:[%s124 + $0xd8] sm:$0xff]
        %v182 = vld [vmem:[%s124 + $0xe0] sm:$0xff]
        %v183 = vld [vmem:[%s124 + $0xe8] sm:$0xff]
        %v184 = vld [vmem:[%s124 + $0xf0] sm:$0xff]
        %v185 = vld [vmem:[%s124 + $0xf8] sm:$0xff]
        %v186 = vld [vmem:[%s124 + $0x100] sm:$0xff]
        %v187 = vld [vmem:[%s124 + $0x108] sm:$0xff]
        %v188 = vld [vmem:[%s124 + $0x110] sm:$0xff]
        %v189 = vld [vmem:[%s124 + $0x118] sm:$0xff]
        %v190 = vld [vmem:[%s124 + $0x120] sm:$0xff]
        %v191 = vld [vmem:[%s124 + $0x128] sm:$0xff]
        %v192 = vld [vmem:[%s124 + $0x130] sm:$0xff]
        %v193 = vld [vmem:[%s124 + $0x138] sm:$0xff]
        %v194 = vld [vmem:[%s124 + $0x140] sm:$0xff]
        %v195 = vld [vmem:[%s124 + $0x148] sm:$0xff]
        %v196 = vld [vmem:[%s124 + $0x150] sm:$0xff]
        %v197 = vld [vmem:[%s124 + $0x158] sm:$0xff]
        %v198 = vld [vmem:[%s124 + $0x160] sm:$0xff]
        %v199 = vld [vmem:[%s124 + $0x168] sm:$0xff]
        %v200 = vld [vmem:[%s124 + $0x170] sm:$0xff]
        %v201 = vld [vmem:[%s124 + $0x178] sm:$0xff]
        %v202 = vld [vmem:[%s124 + $0x180] sm:$0xff]
        %v203 = vld [vmem:[%s124 + $0x188] sm:$0xff]
        %v204 = vld [vmem:[%s124 + $0x190] sm:$0xff]
        %v205 = vld [vmem:[%s124 + $0x198] sm:$0xff]
        %v206 = vld [vmem:[%s124 + $0x1a0] sm:$0xff]
        %v207 = vld [vmem:[%s124 + $0x1a8] sm:$0xff]
        %v208 = vld [vmem:[%s124 + $0x1b0] sm:$0xff]
        %v209 = vld [vmem:[%s124 + $0x1b8] sm:$0xff]
        %v210 = vld [vmem:[%s124 + $0x1c0] sm:$0xff]
        %v211 = vld [vmem:[%s124 + $0x1c8] sm:$0xff]
        %v212 = vld [vmem:[%s124 + $0x1d0] sm:$0xff]
        %v213 = vld [vmem:[%s124 + $0x1d8] sm:$0xff]
        %v214 = vld [vmem:[%s124 + $0x1e0] sm:$0xff]
        %v215 = vld [vmem:[%s124 + $0x1e8] sm:$0xff]
        %v216 = vld [vmem:[%s124 + $0x1f0] sm:$0xff]
        %v217 = vld [vmem:[%s124 + $0x1f8] sm:$0xff]
        %v218 = vld [vmem:[%s124 + $0x200] sm:$0xff]
        %v219 = vld [vmem:[%s124 + $0x208] sm:$0xff]
        %v220 = vld [vmem:[%s124 + $0x210] sm:$0xff]
        %v221 = vld [vmem:[%s124 + $0x218] sm:$0xff]
        %v222 = vld [vmem:[%s124 + $0x220] sm:$0xff]
        %v223 = vld [vmem:[%s124 + $0x228] sm:$0xff]
        %v224 = vld [vmem:[%s124 + $0x230] sm:$0xff]
        %v225 = vld [vmem:[%s124 + $0x238] sm:$0xff]
        %v226 = vld [vmem:[%s124 + $0x240] sm:$0xff]
        %v227 = vld [vmem:[%s124 + $0x248] sm:$0xff]
        %v228 = vld [vmem:[%s124 + $0x250] sm:$0xff]
        %v229 = vld [vmem:[%s124 + $0x258] sm:$0xff]
        %v230 = vld [vmem:[%s124 + $0x260] sm:$0xff]
        %v231 = vld [vmem:[%s124 + $0x268] sm:$0xff]
        %v232 = vld [vmem:[%s124 + $0x270] sm:$0xff]
        %v233 = vld [vmem:[%s124 + $0x278] sm:$0xff]
        %v234 = vld [vmem:[%s124 + $0x280] sm:$0xff]
        %v235 = vld [vmem:[%s124 + $0x288] sm:$0xff]
        %v236 = vld [vmem:[%s124 + $0x290] sm:$0xff]
        %v237 = vld [vmem:[%s124 + $0x298] sm:$0xff]
        %v238 = vld [vmem:[%s124 + $0x2a0] sm:$0xff]
        %v239 = vld [vmem:[%s124 + $0x2a8] sm:$0xff]
        %v240 = vld [vmem:[%s124 + $0x2b0] sm:$0xff]
        %v241 = vld [vmem:[%s124 + $0x2b8] sm:$0xff]
        %v242 = vld [vmem:[%s124 + $0x2c0] sm:$0xff]
        %v243 = vld [vmem:[%s124 + $0x2c8] sm:$0xff]
        %v244 = vld [vmem:[%s124 + $0x2d0] sm:$0xff]
        %v245 = vld [vmem:[%s124 + $0x2d8] sm:$0xff]
        %v246 = vld [vmem:[%s124 + $0x2e0] sm:$0xff]
        %v247 = vld [vmem:[%s124 + $0x2e8] sm:$0xff]
        %v248 = vld [vmem:[%s124 + $0x2f0] sm:$0xff]
        %v249 = vld [vmem:[%s124 + $0x2f8] sm:$0xff]
        %v250 = vld [vmem:[%s124 + $0x300] sm:$0xff]
        %v251 = vld [vmem:[%s124 + $0x308] sm:$0xff]
        %v252 = vld [vmem:[%s124 + $0x310] sm:$0xff]
        %v253 = vld [vmem:[%s124 + $0x318] sm:$0xff]
        %v254 = vld [vmem:[%s124 + $0x320] sm:$0xff]
        %v255 = vld [vmem:[%s124 + $0x328] sm:$0xff]
        %v256 = vld [vmem:[%s124 + $0x330] sm:$0xff]
        %v257 = vld [vmem:[%s124 + $0x338] sm:$0xff]
        %v258 = vld [vmem:[%s124 + $0x340] sm:$0xff]
        %v259 = vld [vmem:[%s124 + $0x348] sm:$0xff]
        %v260 = vld [vmem:[%s124 + $0x350] sm:$0xff]
        %v261 = vld [vmem:[%s124 + $0x358] sm:$0xff]
        %v262 = vld [vmem:[%s124 + $0x360] sm:$0xff]
        %v263 = vld [vmem:[%s124 + $0x368] sm:$0xff]
        %v264 = vld [vmem:[%s124 + $0x370] sm:$0xff]
        %v265 = vld [vmem:[%s124 + $0x378] sm:$0xff]
        %v266 = vld [vmem:[%s124 + $0x380] sm:$0xff]
        %v267 = vld [vmem:[%s124 + $0x388] sm:$0xff]
        %v268 = vld [vmem:[%s124 + $0x390] sm:$0xff]
        %v269 = vld [vmem:[%s124 + $0x398] sm:$0xff]
        %v270 = vld [vmem:[%s124 + $0x3a0] sm:$0xff]
        %v271 = vld [vmem:[%s124 + $0x3a8] sm:$0xff]
        %v272 = vld [vmem:[%s124 + $0x3b0] sm:$0xff]
        %v273 = vld [vmem:[%s124 + $0x3b8] sm:$0xff]
        %v274 = vld [vmem:[%s124 + $0x3c0] sm:$0xff]
        %v275 = vld [vmem:[%s124 + $0x3c8] sm:$0xff]
        %v276 = vld [vmem:[%s124 + $0x3d0] sm:$0xff]
        %v277 = vld [vmem:[%s124 + $0x3d8] sm:$0xff]
        %v278 = vld [vmem:[%s124 + $0x3e0] sm:$0xff]
        %v279 = vld [vmem:[%s124 + $0x3e8] sm:$0xff]
        %v280 = vld [vmem:[%s124 + $0x3f0] sm:$0xff]
        %v281 = vld [vmem:[%s124 + $0x3f8] sm:$0xff]
        %v282 = vld [vmem:[%s124 + $0x400] sm:$0xff]
        %v283 = vld [vmem:[%s124 + $0x408] sm:$0xff]
        %v284 = vld [vmem:[%s124 + $0x410] sm:$0xff]
        %v285 = vld [vmem:[%s124 + $0x418] sm:$0xff]
        %v286 = vld [vmem:[%s124 + $0x420] sm:$0xff]
        %v287 = vld [vmem:[%s124 + $0x428] sm:$0xff]
        %v288 = vld [vmem:[%s124 + $0x430] sm:$0xff]
        %v289 = vld [vmem:[%s124 + $0x438] sm:$0xff]
        %v290 = vld [vmem:[%s124 + $0x440] sm:$0xff]
        %v291 = vld [vmem:[%s124 + $0x448] sm:$0xff]
        %v292 = vld [vmem:[%s124 + $0x450] sm:$0xff]
        %v293 = vld [vmem:[%s124 + $0x458] sm:$0xff]
        %v294 = vld [vmem:[%s124 + $0x460] sm:$0xff]
        %v295 = vld [vmem:[%s124 + $0x468] sm:$0xff]
        %v296 = vld [vmem:[%s124 + $0x470] sm:$0xff]
        %v297 = vld [vmem:[%s124 + $0x478] sm:$0xff]
        %v298 = vld [vmem:[%s124 + $0x480] sm:$0xff]
        %v299 = vld [vmem:[%s124 + $0x488] sm:$0xff]
        %v300 = vld [vmem:[%s124 + $0x490] sm:$0xff]
        %v301 = vld [vmem:[%s124 + $0x498] sm:$0xff]
        %v302 = vld [vmem:[%s124 + $0x4a0] sm:$0xff]
        %v303 = vld [vmem:[%s124 + $0x4a8] sm:$0xff]
        %v304 = vld [vmem:[%s124 + $0x4b0] sm:$0xff]
        %v305 = vld [vmem:[%s124 + $0x4b8] sm:$0xff]
        %v306 = vld [vmem:[%s124 + $0x4c0] sm:$0xff]
        %v307 = vld [vmem:[%s124 + $0x4c8] sm:$0xff]
        %v308 = vld [vmem:[%s124 + $0x4d0] sm:$0xff]
        %v309 = vld [vmem:[%s124 + $0x4d8] sm:$0xff]
        %v310 = vld [vmem:[%s124 + $0x4e0] sm:$0xff]
        %v311 = vld [vmem:[%s124 + $0x4e8] sm:$0xff]
        %v312 = vld [vmem:[%s124 + $0x4f0] sm:$0xff]
        %v313 = vld [vmem:[%s124 + $0x4f8] sm:$0xff]
        %v314 = vld [vmem:[%s124 + $0x500] sm:$0xff]
        %v315 = vld [vmem:[%s124 + $0x508] sm:$0xff]
        %v316 = vld [vmem:[%s124 + $0x510] sm:$0xff]
        %v317 = vld [vmem:[%s124 + $0x518] sm:$0xff]
        %v318 = vld [vmem:[%s124 + $0x520] sm:$0xff]
        %v319 = vld [vmem:[%s124 + $0x528] sm:$0xff]
        %v320 = vld [vmem:[%s124 + $0x530] sm:$0xff]
        %v321 = vld [vmem:[%s124 + $0x538] sm:$0xff]
        %v322 = vld [vmem:[%s124 + $0x540] sm:$0xff]
        %v323 = vld [vmem:[%s124 + $0x548] sm:$0xff]
        %v324 = vld [vmem:[%s124 + $0x550] sm:$0xff]
        %v325 = vld [vmem:[%s124 + $0x558] sm:$0xff]
        %v326 = vld [vmem:[%s124 + $0x560] sm:$0xff]
        %v327 = vld [vmem:[%s124 + $0x568] sm:$0xff]
        %v328 = vld [vmem:[%s124 + $0x570] sm:$0xff]
        %v329 = vld [vmem:[%s124 + $0x578] sm:$0xff]
        %v330 = vld [vmem:[%s124 + $0x580] sm:$0xff]
        %v331 = vld [vmem:[%s124 + $0x588] sm:$0xff]
        %v332 = vld [vmem:[%s124 + $0x590] sm:$0xff]
        %v333 = vld [vmem:[%s124 + $0x598] sm:$0xff]
        %v334 = vld [vmem:[%s124 + $0x5a0] sm:$0xff]
        %v335 = vld [vmem:[%s124 + $0x5a8] sm:$0xff]
        %v336 = vld [vmem:[%s124 + $0x5b0] sm:$0xff]
        %v337 = vld [vmem:[%s124 + $0x5b8] sm:$0xff]
        %v338 = vld [vmem:[%s124 + $0x5c0] sm:$0xff]
        %v339 = vld [vmem:[%s124 + $0x5c8] sm:$0xff]
        %v340 = vld [vmem:[%s124 + $0x5d0] sm:$0xff]
        %v341 = vld [vmem:[%s124 + $0x5d8] sm:$0xff]
        %v342 = vld [vmem:[%s124 + $0x5e0] sm:$0xff]
        %v343 = vld [vmem:[%s124 + $0x5e8] sm:$0xff]
        %v344 = vld [vmem:[%s124 + $0x5f0] sm:$0xff]
        %v345 = vld [vmem:[%s124 + $0x5f8] sm:$0xff]
        %v346 = vld [vmem:[%s124 + $0x600] sm:$0xff]
        %v347 = vld [vmem:[%s124 + $0x608] sm:$0xff]
        %v348 = vld [vmem:[%s124 + $0x610] sm:$0xff]
        %v349 = vld [vmem:[%s124 + $0x618] sm:$0xff]
        %v350 = vld [vmem:[%s124 + $0x620] sm:$0xff]
        %v351 = vld [vmem:[%s124 + $0x628] sm:$0xff]
        %v352 = vld [vmem:[%s124 + $0x630] sm:$0xff]
        %v353 = vld [vmem:[%s124 + $0x638] sm:$0xff]
        %v354 = vld [vmem:[%s124 + $0x640] sm:$0xff]
        %v355 = vld [vmem:[%s124 + $0x648] sm:$0xff]
        %v356 = vld [vmem:[%s124 + $0x650] sm:$0xff]
        %v357 = vld [vmem:[%s124 + $0x658] sm:$0xff]
        %v358 = vld [vmem:[%s124 + $0x660] sm:$0xff]
        %v359 = vld [vmem:[%s124 + $0x668] sm:$0xff]
        %v360 = vld [vmem:[%s124 + $0x670] sm:$0xff]
        %v361 = vld [vmem:[%s124 + $0x678] sm:$0xff]
        %v362 = vld [vmem:[%s124 + $0x680] sm:$0xff]
        %v363 = vld [vmem:[%s124 + $0x688] sm:$0xff]
        %v364 = vld [vmem:[%s124 + $0x690] sm:$0xff]
        %v365 = vld [vmem:[%s124 + $0x698] sm:$0xff]
        %v366 = vld [vmem:[%s124 + $0x6a0] sm:$0xff]
        %v367 = vld [vmem:[%s124 + $0x6a8] sm:$0xff]
        %v368 = vld [vmem:[%s124 + $0x6b0] sm:$0xff]
        %v369 = vld [vmem:[%s124 + $0x6b8] sm:$0xff]
        %v370 = vld [vmem:[%s124 + $0x6c0] sm:$0xff]
        %v371 = vld [vmem:[%s124 + $0x6c8] sm:$0xff]
        %v372 = vld [vmem:[%s124 + $0x6d0] sm:$0xff]
        %v373 = vld [vmem:[%s124 + $0x6d8] sm:$0xff]
        %v374 = vld [vmem:[%s124 + $0x6e0] sm:$0xff]
        %v375 = vld [vmem:[%s124 + $0x6e8] sm:$0xff]
        %v376 = vld [vmem:[%s124 + $0x6f0] sm:$0xff]
        %v377 = vld [vmem:[%s124 + $0x6f8] sm:$0xff]
        %v378 = vld [vmem:[%s124 + $0x700] sm:$0xff]
        %v379 = vld [vmem:[%s124 + $0x708] sm:$0xff]
        %v380 = vld [vmem:[%s124 + $0x710] sm:$0xff]
        %v381 = vld [vmem:[%s124 + $0x718] sm:$0xff]
        %v382 = vld [vmem:[%s124 + $0x720] sm:$0xff]
        %v383 = vld [vmem:[%s124 + $0x728] sm:$0xff]
        %v384 = vld [vmem:[%s124 + $0x730] sm:$0xff]
        %v385 = vld [vmem:[%s124 + $0x738] sm:$0xff]
        %v386 = vld [vmem:[%s124 + $0x740] sm:$0xff]
        %v387 = vld [vmem:[%s124 + $0x748] sm:$0xff]
        %v388 = vld [vmem:[%s124 + $0x750] sm:$0xff]
        %v389 = vld [vmem:[%s124 + $0x758] sm:$0xff]
        %v390 = vld [vmem:[%s124 + $0x760] sm:$0xff]
        %v391 = vld [vmem:[%s124 + $0x768] sm:$0xff]
        %v392 = vld [vmem:[%s124 + $0x770] sm:$0xff]
        %v393 = vld [vmem:[%s124 + $0x778] sm:$0xff]
        %v394 = vld [vmem:[%s124 + $0x780] sm:$0xff]
        %v395 = vld [vmem:[%s124 + $0x788] sm:$0xff]
        %v396 = vld [vmem:[%s124 + $0x790] sm:$0xff]
        %v397 = vld [vmem:[%s124 + $0x798] sm:$0xff]
        %v398 = vld [vmem:[%s124 + $0x7a0] sm:$0xff]
        %v399 = vld [vmem:[%s124 + $0x7a8] sm:$0xff]
        %v400 = vld [vmem:[%s124 + $0x7b0] sm:$0xff]
        %v401 = vld [vmem:[%s124 + $0x7b8] sm:$0xff]
        %v402 = vld [vmem:[%s124 + $0x7c0] sm:$0xff]
        %v403 = vld [vmem:[%s124 + $0x7c8] sm:$0xff]
        %v404 = vld [vmem:[%s124 + $0x7d0] sm:$0xff]
        %v405 = vld [vmem:[%s124 + $0x7d8] sm:$0xff]
        %v406 = vld [vmem:[%s124 + $0x7e0] sm:$0xff]
        %v407 = vld [vmem:[%s124 + $0x7e8] sm:$0xff]
        %v408 = vld [vmem:[%s124 + $0x7f0] sm:$0xff]
        %v409 = vld [vmem:[%s124 + $0x7f8] sm:$0xff]
        %v410 = vmax.f32 %v154, %v155
        %v411 = vmax.f32 %v410, %v156
        %v412 = vmax.f32 %v411, %v157
        %v413 = vmax.f32 %v412, %v158
        %v414 = vmax.f32 %v413, %v159
        %v415 = vmax.f32 %v414, %v160
        %vm416 = vcmask 850944
        %v417 = vsel %vm416, %v161, -inf
        %v418 = vmax.f32 %v415, %v417
        %419 = vmax.xlane.f32.xlu0 %v418
        %v420 = vpop.xlane.xlu0 %419
        %v421 = vmax.f32 %v162, %v163
        %v422 = vmax.f32 %v421, %v164
        %v423 = vmax.f32 %v422, %v165
        %v424 = vmax.f32 %v423, %v166
        %v425 = vmax.f32 %v424, %v167
        %v426 = vmax.f32 %v425, %v168
        %v427 = vsel %vm416, %v169, -inf
        %v428 = vmax.f32 %v426, %v427
        %429 = vmax.xlane.f32.xlu0 %v428
        %v430 = vpop.xlane.xlu0 %429
        %v431 = vmax.f32 %v170, %v171
        %v432 = vmax.f32 %v431, %v172
        %v433 = vmax.f32 %v432, %v173
        %v434 = vmax.f32 %v433, %v174
        %v435 = vmax.f32 %v434, %v175
        %v436 = vmax.f32 %v435, %v176
        %v437 = vsel %vm416, %v177, -inf
        %v438 = vmax.f32 %v436, %v437
        %439 = vmax.xlane.f32.xlu0 %v438
        %v440 = vpop.xlane.xlu0 %439
        %v441 = vmax.f32 %v178, %v179
        %v442 = vmax.f32 %v441, %v180
        %v443 = vmax.f32 %v442, %v181
        %v444 = vmax.f32 %v443, %v182
        %v445 = vmax.f32 %v444, %v183
        %v446 = vmax.f32 %v445, %v184
        %v447 = vsel %vm416, %v185, -inf
        %v448 = vmax.f32 %v446, %v447
        %449 = vmax.xlane.f32.xlu0 %v448
        %v450 = vpop.xlane.xlu0 %449
        %v451 = vmax.f32 %v186, %v187
        %v452 = vmax.f32 %v451, %v188
        %v453 = vmax.f32 %v452, %v189
        %v454 = vmax.f32 %v453, %v190
        %v455 = vmax.f32 %v454, %v191
        %v456 = vmax.f32 %v455, %v192
        %v457 = vsel %vm416, %v193, -inf
        %v458 = vmax.f32 %v456, %v457
        %459 = vmax.xlane.f32.xlu0 %v458
        %v460 = vpop.xlane.xlu0 %459
        %v461 = vmax.f32 %v194, %v195
        %v462 = vmax.f32 %v461, %v196
        %v463 = vmax.f32 %v462, %v197
        %v464 = vmax.f32 %v463, %v198
        %v465 = vmax.f32 %v464, %v199
        %v466 = vmax.f32 %v465, %v200
        %v467 = vsel %vm416, %v201, -inf
        %v468 = vmax.f32 %v466, %v467
        %469 = vmax.xlane.f32.xlu0 %v468
        %v470 = vpop.xlane.xlu0 %469
        %v471 = vmax.f32 %v202, %v203
        %v472 = vmax.f32 %v471, %v204
        %v473 = vmax.f32 %v472, %v205
        %v474 = vmax.f32 %v473, %v206
        %v475 = vmax.f32 %v474, %v207
        %v476 = vmax.f32 %v475, %v208
        %v477 = vsel %vm416, %v209, -inf
        %v478 = vmax.f32 %v476, %v477
        %479 = vmax.xlane.f32.xlu0 %v478
        %v480 = vpop.xlane.xlu0 %479
        %v481 = vmax.f32 %v210, %v211
        %v482 = vmax.f32 %v481, %v212
        %v483 = vmax.f32 %v482, %v213
        %v484 = vmax.f32 %v483, %v214
        %v485 = vmax.f32 %v484, %v215
        %v486 = vmax.f32 %v485, %v216
        %v487 = vsel %vm416, %v217, -inf
        %v488 = vmax.f32 %v486, %v487
        %489 = vmax.xlane.f32.xlu0 %v488
        %v490 = vpop.xlane.xlu0 %489
        %v491 = vmax.f32 %v218, %v219
        %v492 = vmax.f32 %v491, %v220
        %v493 = vmax.f32 %v492, %v221
        %v494 = vmax.f32 %v493, %v222
        %v495 = vmax.f32 %v494, %v223
        %v496 = vmax.f32 %v495, %v224
        %v497 = vsel %vm416, %v225, -inf
        %v498 = vmax.f32 %v496, %v497
        %499 = vmax.xlane.f32.xlu0 %v498
        %v500 = vpop.xlane.xlu0 %499
        %v501 = vmax.f32 %v226, %v227
        %v502 = vmax.f32 %v501, %v228
        %v503 = vmax.f32 %v502, %v229
        %v504 = vmax.f32 %v503, %v230
        %v505 = vmax.f32 %v504, %v231
        %v506 = vmax.f32 %v505, %v232
        %v507 = vsel %vm416, %v233, -inf
        %v508 = vmax.f32 %v506, %v507
        %509 = vmax.xlane.f32.xlu0 %v508
        %v510 = vpop.xlane.xlu0 %509
        %v511 = vmax.f32 %v234, %v235
        %v512 = vmax.f32 %v511, %v236
        %v513 = vmax.f32 %v512, %v237
        %v514 = vmax.f32 %v513, %v238
        %v515 = vmax.f32 %v514, %v239
        %v516 = vmax.f32 %v515, %v240
        %v517 = vsel %vm416, %v241, -inf
        %v518 = vmax.f32 %v516, %v517
        %519 = vmax.xlane.f32.xlu0 %v518
        %v520 = vpop.xlane.xlu0 %519
        %v521 = vmax.f32 %v242, %v243
        %v522 = vmax.f32 %v521, %v244
        %v523 = vmax.f32 %v522, %v245
        %v524 = vmax.f32 %v523, %v246
        %v525 = vmax.f32 %v524, %v247
        %v526 = vmax.f32 %v525, %v248
        %v527 = vsel %vm416, %v249, -inf
        %v528 = vmax.f32 %v526, %v527
        %529 = vmax.xlane.f32.xlu0 %v528
        %v530 = vpop.xlane.xlu0 %529
        %v531 = vmax.f32 %v250, %v251
        %v532 = vmax.f32 %v531, %v252
        %v533 = vmax.f32 %v532, %v253
        %v534 = vmax.f32 %v533, %v254
        %v535 = vmax.f32 %v534, %v255
        %v536 = vmax.f32 %v535, %v256
        %v537 = vsel %vm416, %v257, -inf
        %v538 = vmax.f32 %v536, %v537
        %539 = vmax.xlane.f32.xlu0 %v538
        %v540 = vpop.xlane.xlu0 %539
        %v541 = vmax.f32 %v258, %v259
        %v542 = vmax.f32 %v541, %v260
        %v543 = vmax.f32 %v542, %v261
        %v544 = vmax.f32 %v543, %v262
        %v545 = vmax.f32 %v544, %v263
        %v546 = vmax.f32 %v545, %v264
        %v547 = vsel %vm416, %v265, -inf
        %v548 = vmax.f32 %v546, %v547
        %549 = vmax.xlane.f32.xlu0 %v548
        %v550 = vpop.xlane.xlu0 %549
        %v551 = vmax.f32 %v266, %v267
        %v552 = vmax.f32 %v551, %v268
        %v553 = vmax.f32 %v552, %v269
        %v554 = vmax.f32 %v553, %v270
        %v555 = vmax.f32 %v554, %v271
        %v556 = vmax.f32 %v555, %v272
        %v557 = vsel %vm416, %v273, -inf
        %v558 = vmax.f32 %v556, %v557
        %559 = vmax.xlane.f32.xlu0 %v558
        %v560 = vpop.xlane.xlu0 %559
        %v561 = vmax.f32 %v274, %v275
        %v562 = vmax.f32 %v561, %v276
        %v563 = vmax.f32 %v562, %v277
        %v564 = vmax.f32 %v563, %v278
        %v565 = vmax.f32 %v564, %v279
        %v566 = vmax.f32 %v565, %v280
        %v567 = vsel %vm416, %v281, -inf
        %v568 = vmax.f32 %v566, %v567
        %569 = vmax.xlane.f32.xlu0 %v568
        %v570 = vpop.xlane.xlu0 %569
        %v571 = vmax.f32 %v282, %v283
        %v572 = vmax.f32 %v571, %v284
        %v573 = vmax.f32 %v572, %v285
        %v574 = vmax.f32 %v573, %v286
        %v575 = vmax.f32 %v574, %v287
        %v576 = vmax.f32 %v575, %v288
        %v577 = vsel %vm416, %v289, -inf
        %v578 = vmax.f32 %v576, %v577
        %579 = vmax.xlane.f32.xlu0 %v578
        %v580 = vpop.xlane.xlu0 %579
        %v581 = vmax.f32 %v290, %v291
        %v582 = vmax.f32 %v581, %v292
        %v583 = vmax.f32 %v582, %v293
        %v584 = vmax.f32 %v583, %v294
        %v585 = vmax.f32 %v584, %v295
        %v586 = vmax.f32 %v585, %v296
        %v587 = vsel %vm416, %v297, -inf
        %v588 = vmax.f32 %v586, %v587
        %589 = vmax.xlane.f32.xlu0 %v588
        %v590 = vpop.xlane.xlu0 %589
        %v591 = vmax.f32 %v298, %v299
        %v592 = vmax.f32 %v591, %v300
        %v593 = vmax.f32 %v592, %v301
        %v594 = vmax.f32 %v593, %v302
        %v595 = vmax.f32 %v594, %v303
        %v596 = vmax.f32 %v595, %v304
        %v597 = vsel %vm416, %v305, -inf
        %v598 = vmax.f32 %v596, %v597
        %599 = vmax.xlane.f32.xlu0 %v598
        %v600 = vpop.xlane.xlu0 %599
        %v601 = vmax.f32 %v306, %v307
        %v602 = vmax.f32 %v601, %v308
        %v603 = vmax.f32 %v602, %v309
        %v604 = vmax.f32 %v603, %v310
        %v605 = vmax.f32 %v604, %v311
        %v606 = vmax.f32 %v605, %v312
        %v607 = vsel %vm416, %v313, -inf
        %v608 = vmax.f32 %v606, %v607
        %609 = vmax.xlane.f32.xlu0 %v608
        %v610 = vpop.xlane.xlu0 %609
        %v611 = vmax.f32 %v314, %v315
        %v612 = vmax.f32 %v611, %v316
        %v613 = vmax.f32 %v612, %v317
        %v614 = vmax.f32 %v613, %v318
        %v615 = vmax.f32 %v614, %v319
        %v616 = vmax.f32 %v615, %v320
        %v617 = vsel %vm416, %v321, -inf
        %v618 = vmax.f32 %v616, %v617
        %619 = vmax.xlane.f32.xlu0 %v618
        %v620 = vpop.xlane.xlu0 %619
        %v621 = vmax.f32 %v322, %v323
        %v622 = vmax.f32 %v621, %v324
        %v623 = vmax.f32 %v622, %v325
        %v624 = vmax.f32 %v623, %v326
        %v625 = vmax.f32 %v624, %v327
        %v626 = vmax.f32 %v625, %v328
        %v627 = vsel %vm416, %v329, -inf
        %v628 = vmax.f32 %v626, %v627
        %629 = vmax.xlane.f32.xlu0 %v628
        %v630 = vpop.xlane.xlu0 %629
        %v631 = vmax.f32 %v330, %v331
        %v632 = vmax.f32 %v631, %v332
        %v633 = vmax.f32 %v632, %v333
        %v634 = vmax.f32 %v633, %v334
        %v635 = vmax.f32 %v634, %v335
        %v636 = vmax.f32 %v635, %v336
        %v637 = vsel %vm416, %v337, -inf
        %v638 = vmax.f32 %v636, %v637
        %639 = vmax.xlane.f32.xlu0 %v638
        %v640 = vpop.xlane.xlu0 %639
        %v641 = vmax.f32 %v338, %v339
        %v642 = vmax.f32 %v641, %v340
        %v643 = vmax.f32 %v642, %v341
        %v644 = vmax.f32 %v643, %v342
        %v645 = vmax.f32 %v644, %v343
        %v646 = vmax.f32 %v645, %v344
        %v647 = vsel %vm416, %v345, -inf
        %v648 = vmax.f32 %v646, %v647
        %649 = vmax.xlane.f32.xlu0 %v648
        %v650 = vpop.xlane.xlu0 %649
        %v651 = vmax.f32 %v346, %v347
        %v652 = vmax.f32 %v651, %v348
        %v653 = vmax.f32 %v652, %v349
        %v654 = vmax.f32 %v653, %v350
        %v655 = vmax.f32 %v654, %v351
        %v656 = vmax.f32 %v655, %v352
        %v657 = vsel %vm416, %v353, -inf
        %v658 = vmax.f32 %v656, %v657
        %659 = vmax.xlane.f32.xlu0 %v658
        %v660 = vpop.xlane.xlu0 %659
        %v661 = vmax.f32 %v354, %v355
        %v662 = vmax.f32 %v661, %v356
        %v663 = vmax.f32 %v662, %v357
        %v664 = vmax.f32 %v663, %v358
        %v665 = vmax.f32 %v664, %v359
        %v666 = vmax.f32 %v665, %v360
        %v667 = vsel %vm416, %v361, -inf
        %v668 = vmax.f32 %v666, %v667
        %669 = vmax.xlane.f32.xlu0 %v668
        %v670 = vpop.xlane.xlu0 %669
        %v671 = vmax.f32 %v362, %v363
        %v672 = vmax.f32 %v671, %v364
        %v673 = vmax.f32 %v672, %v365
        %v674 = vmax.f32 %v673, %v366
        %v675 = vmax.f32 %v674, %v367
        %v676 = vmax.f32 %v675, %v368
        %v677 = vsel %vm416, %v369, -inf
        %v678 = vmax.f32 %v676, %v677
        %679 = vmax.xlane.f32.xlu0 %v678
        %v680 = vpop.xlane.xlu0 %679
        %v681 = vmax.f32 %v370, %v371
        %v682 = vmax.f32 %v681, %v372
        %v683 = vmax.f32 %v682, %v373
        %v684 = vmax.f32 %v683, %v374
        %v685 = vmax.f32 %v684, %v375
        %v686 = vmax.f32 %v685, %v376
        %v687 = vsel %vm416, %v377, -inf
        %v688 = vmax.f32 %v686, %v687
        %689 = vmax.xlane.f32.xlu0 %v688
        %v690 = vpop.xlane.xlu0 %689
        %v691 = vmax.f32 %v378, %v379
        %v692 = vmax.f32 %v691, %v380
        %v693 = vmax.f32 %v692, %v381
        %v694 = vmax.f32 %v693, %v382
        %v695 = vmax.f32 %v694, %v383
        %v696 = vmax.f32 %v695, %v384
        %v697 = vsel %vm416, %v385, -inf
        %v698 = vmax.f32 %v696, %v697
        %699 = vmax.xlane.f32.xlu0 %v698
        %v700 = vpop.xlane.xlu0 %699
        %v701 = vmax.f32 %v386, %v387
        %v702 = vmax.f32 %v701, %v388
        %v703 = vmax.f32 %v702, %v389
        %v704 = vmax.f32 %v703, %v390
        %v705 = vmax.f32 %v704, %v391
        %v706 = vmax.f32 %v705, %v392
        %v707 = vsel %vm416, %v393, -inf
        %v708 = vmax.f32 %v706, %v707
        %709 = vmax.xlane.f32.xlu0 %v708
        %v710 = vpop.xlane.xlu0 %709
        %v711 = vmax.f32 %v394, %v395
        %v712 = vmax.f32 %v711, %v396
        %v713 = vmax.f32 %v712, %v397
        %v714 = vmax.f32 %v713, %v398
        %v715 = vmax.f32 %v714, %v399
        %v716 = vmax.f32 %v715, %v400
        %v717 = vsel %vm416, %v401, -inf
        %v718 = vmax.f32 %v716, %v717
        %719 = vmax.xlane.f32.xlu0 %v718
        %v720 = vpop.xlane.xlu0 %719
        %v721 = vmax.f32 %v402, %v403
        %v722 = vmax.f32 %v721, %v404
        %v723 = vmax.f32 %v722, %v405
        %v724 = vmax.f32 %v723, %v406
        %v725 = vmax.f32 %v724, %v407
        %v726 = vmax.f32 %v725, %v408
        %v727 = vsel %vm416, %v409, -inf
        %v728 = vmax.f32 %v726, %v727
        %729 = vmax.xlane.f32.xlu0 %v728
        %v730 = vpop.xlane.xlu0 %729
        %731 = vxpose.xlu0.b32.start [1/16] %v420, 128
        %732 = vxpose.xlu0.b32.cont [2/16] %v430, 128
        %733 = vxpose.xlu0.b32.cont [3/16] %v440, 128
        %734 = vxpose.xlu0.b32.cont [4/16] %v450, 128
        %735 = vxpose.xlu0.b32.cont [5/16] %v460, 128
        %736 = vxpose.xlu0.b32.cont [6/16] %v470, 128
        %737 = vxpose.xlu0.b32.cont [7/16] %v480, 128
        %738 = vxpose.xlu0.b32.cont [8/16] %v490, 128
        %739 = vxpose.xlu0.b32.cont [9/16] %v500, 128
        %740 = vxpose.xlu0.b32.cont [10/16] %v510, 128
        %741 = vxpose.xlu0.b32.cont [11/16] %v520, 128
        %742 = vxpose.xlu0.b32.cont [12/16] %v530, 128
        %743 = vxpose.xlu0.b32.cont [13/16] %v540, 128
        %744 = vxpose.xlu0.b32.cont [14/16] %v550, 128
        %745 = vxpose.xlu0.b32.cont [15/16] %v560, 128
        %746 = vxpose.xlu0.b32.end [16/16] %v570, 128
        %v747 = vpop.trf.xlu0
        %v748 = vpop.trf.xlu0
        %v749 = vpop.trf.xlu0
        %v750 = vpop.trf.xlu0
        %v751 = vpop.trf.xlu0
        %v752 = vpop.trf.xlu0
        %v753 = vpop.trf.xlu0
        %v754 = vpop.trf.xlu0
        %v755 = vpop.trf.xlu0
        %v756 = vpop.trf.xlu0
        %v757 = vpop.trf.xlu0
        %v758 = vpop.trf.xlu0
        %v759 = vpop.trf.xlu0
        %v760 = vpop.trf.xlu0
        %v761 = vpop.trf.xlu0
        %v762 = vpop.trf.xlu0
        %763 = vxpose.xlu0.b32.start [1/16] %v580, 128
        %764 = vxpose.xlu0.b32.cont [2/16] %v590, 128
        %765 = vxpose.xlu0.b32.cont [3/16] %v600, 128
        %766 = vxpose.xlu0.b32.cont [4/16] %v610, 128
        %767 = vxpose.xlu0.b32.cont [5/16] %v620, 128
        %768 = vxpose.xlu0.b32.cont [6/16] %v630, 128
        %769 = vxpose.xlu0.b32.cont [7/16] %v640, 128
        %770 = vxpose.xlu0.b32.cont [8/16] %v650, 128
        %771 = vxpose.xlu0.b32.cont [9/16] %v660, 128
        %772 = vxpose.xlu0.b32.cont [10/16] %v670, 128
        %773 = vxpose.xlu0.b32.cont [11/16] %v680, 128
        %774 = vxpose.xlu0.b32.cont [12/16] %v690, 128
        %775 = vxpose.xlu0.b32.cont [13/16] %v700, 128
        %776 = vxpose.xlu0.b32.cont [14/16] %v710, 128
        %777 = vxpose.xlu0.b32.cont [15/16] %v720, 128
        %778 = vxpose.xlu0.b32.end [16/16] %v730, 128
        %v779 = vpop.trf.xlu0
        %v780 = vpop.trf.xlu0
        %v781 = vpop.trf.xlu0
        %v782 = vpop.trf.xlu0
        %v783 = vpop.trf.xlu0
        %v784 = vpop.trf.xlu0
        %v785 = vpop.trf.xlu0
        %v786 = vpop.trf.xlu0
        %v787 = vpop.trf.xlu0
        %v788 = vpop.trf.xlu0
        %v789 = vpop.trf.xlu0
        %v790 = vpop.trf.xlu0
        %v791 = vpop.trf.xlu0
        %v792 = vpop.trf.xlu0
        %v793 = vpop.trf.xlu0
        %v794 = vpop.trf.xlu0
        %v797 = vcombine.low %v747, %v779
        %v799 = vunpack.c.l.s4 1966171168
        %v800 = vunpack.c.0.s8 %v799
        %v801 = vlaneseq
        %v802 = vshrl.u32 %v801, 7
        %v803 = vsub.s32 %v800, %v802
        %v804 = vrot.slane %v797, %v803
        %v806 = vunpack.c.l.s4 1966171168
        %v807 = vunpack.c.0.s8 %v806
        %v808 = vlaneseq
        %v809 = vshrl.u32 %v808, 7
        %v810 = vsub.s32 %v807, %v809
        %v811 = vrot.slane %v804, %v810
        %v813 = vlaneseq
        %vm814 = vcmp.ge.s32.totalorder %v813, 0
        %vm815 = vcmp.lt.s32.totalorder %v813, 256
        %vm816 = vmand %vm814, %vm815
        %817 = vst.msk [vmem:[%s142] sm:$0x3] %vm816, %v811
        %s818 = sand.u32 %s52, 1
        %s819 = scalar_lea.sflag [#allocation4], %s818
        %s820 = sand.u32 %s52, 1
        %s821 = smul.addr %s820, 2
        %s822 = scalar_lea.vmem [#allocation5], %s821
        // Predicated region
        $region29: #{tpu_custom_call.1} parent=23 // pred_check
          %p823 = pneg %p62
        $region30: #{tpu_custom_call.1} parent=23 // pred_check_branch
          %825 = sbr.rel (%p823) target = $region32
        $region31: #{tpu_custom_call.1} parent=23 // pred_region
          %s826 = smul.u32 2, %s18
          %s827 = ssub.s32 3, %s826
          %p828 = scmp.lt.s32.totalorder %s827, 2
          %s829 = scalar_select %p828, %s827, 2
          %s830 = smul.u32 16, %s829
          %s832 = ssub.s32 32, %s830
          %833 = vsyncadd %s819, %s832
          %p834 = scmp.ne.s32.totalorder 0, %s830
          %s835 = smul.addr %s826, 16
          %s836 = scalar_lea.hbm %s1, %s835
          %s837 = sshll.u32 %s829, 4
          %s838 = sshll.u32 %s822, 4
          %s839 = int_to_ptr.vmem [resolvable:$true] %s838
          %841 = dma.vmem_to_hbm [thread:$0]  (%p834), %s839, %s837, %s836, %s819
        $region32: #{tpu_custom_call.1} parent=23 // pred_fallthru
          _
      $region24: #{tpu_custom_call.1} parent=5 // pred_fallthru
        _
      %p842 = scmp.le.s32.totalorder 2, %s13
      // Predicated region
      $region33: #{tpu_custom_call.1} parent=5 // pred_check
        %p843 = pneg %p842
      $region34: #{tpu_custom_call.1} parent=5 // pred_check_branch
        %845 = sbr.rel (%p843) target = $region36
      $region35: #{tpu_custom_call.1} parent=5 // pred_region
        %s846 = ssub.s32 %s13, 2
        // Predicated region
        $region37: #{tpu_custom_call.1} parent=35 // pred_check
          %p847 = pneg %p68
        $region38: #{tpu_custom_call.1} parent=35 // pred_check_branch
          %849 = sbr.rel (%p847) target = $region40
        $region39: #{tpu_custom_call.1} parent=35 // pred_region
          %s850 = sand.u32 %s53, 1
          %s851 = scalar_lea.sflag [#allocation4], %s850
          %s852 = sand.u32 %s53, 1
          %s853 = smul.addr %s852, 2
          %s854 = scalar_lea.vmem [#allocation5], %s853
          %855 = dma.done %s851, 32
        $region40: #{tpu_custom_call.1} parent=35 // pred_fallthru
          _
      $region36: #{tpu_custom_call.1} parent=5 // pred_fallthru
        _
    $region6: #{tpu_custom_call.1} parent=1 // loop_footer
      %s17 = sadd.s32 1, %s13
    $region7: #{tpu_custom_call.1} parent=1 // loop_footer_branch
      %12 = sbr.rel target = $region3
    $region8: #{tpu_custom_call.1} parent=1 // loop_exit
      _
    %856 = vsyncpa [#allocation3], 1
    %s857 = scalar_lea.sflag [#allocation3], 1
    %858 = vsyncpa %s857, 1
    %859 = vsyncpa [#allocation4], 1
    %s860 = scalar_lea.sflag [#allocation4], 1
    %861 = vsyncpa %s860, 1

</llo_original>
